<compile_context>
chip_gen: v7x
topology: tpu7x:2x2x1
jax: 0.10.0
libtpu: 0.0.40
codegen_flags: <defaults>
</compile_context>

<pallas_src>
import functools

import jax
import jax.numpy as jnp
from jax.experimental import pallas as pl
from jax.experimental.pallas import tpu as pltpu


def _fused_lrelu_kernel(x_ref, b_ref, o_ref, *, negative_slope, scale):
    # x_ref: [tm, tn]; b_ref: [tm, 1] (per-row bias) or [1, tn] (per-lane bias).
    v = x_ref[...].astype(jnp.float32) + b_ref[...]            # bias kept in f32
    out = jnp.where(v >= 0, v, v * negative_slope) * scale      # exact leaky_relu
    o_ref[...] = out.astype(o_ref.dtype)


def fused_leaky_relu(x, bias, negative_slope=0.2, scale=2.0 ** 0.5):
    """out = leaky_relu(x + bias, negative_slope) * scale.

    x: [B, C, H, W]; bias: anything reshapeable to [C] (module uses [1, C, 1, 1]).
    """
    B, C, H, W = x.shape
    HW = H * W
    bias_f32 = jnp.reshape(bias, (C,)).astype(jnp.float32)      # keep f32 (tiny)

    if HW >= 128:
        # Main path: rows = (batch, channel), lanes = spatial. Free reshape.
        rows, cols = B * C, HW
        x2 = x.reshape(rows, cols)
        b = jnp.tile(bias_f32, B).reshape(rows, 1)               # per-row column
        bias_is_col = True
    else:
        # Small-spatial path: fold channels into the lane axis so stores use all
        # 128 lanes instead of masked 16/64-lane partial stores.
        rows, cols = B, C * HW
        x2 = x.reshape(rows, cols)
        b = jnp.repeat(bias_f32, HW).reshape(1, cols)            # per-lane row
        bias_is_col = False

    itemsize = jnp.dtype(x.dtype).itemsize

    # Row tile (sublane axis): multiple of 8, or full extent when small.
    ROW_TILE = 256
    tm = rows if rows <= ROW_TILE else ROW_TILE

    # Column tile (lane axis): ~4 MiB per input block in bytes (dtype-aware),
    # multiple of 128. Ragged edges handled by the cdiv grid (Pallas masks them).
    TARGET_BLOCK_BYTES = 4 * 1024 * 1024
    tn_cap = max(512, (TARGET_BLOCK_BYTES // (tm * itemsize)) // 128 * 128)
    tn = cols if cols <= tn_cap else tn_cap

    grid = (pl.cdiv(rows, tm), pl.cdiv(cols, tn))

    if bias_is_col:
        b_spec = pl.BlockSpec((tm, 1), lambda i, j: (i, 0))
    else:
        b_spec = pl.BlockSpec((1, tn), lambda i, j: (0, j))

    kernel = functools.partial(
        _fused_lrelu_kernel,
        negative_slope=float(negative_slope),
        scale=float(scale),
    )

    cost = pl.CostEstimate(
        flops=3 * rows * cols,                                   # add + select + mul
        transcendentals=0,
        bytes_accessed=2 * rows * cols * itemsize + b.size * 4,
    )

    out2 = pl.pallas_call(
        kernel,
        out_shape=jax.ShapeDtypeStruct((rows, cols), x.dtype),
        grid_spec=pltpu.PrefetchScalarGridSpec(
            num_scalar_prefetch=0,
            grid=grid,
            in_specs=[
                pl.BlockSpec((tm, tn), lambda i, j: (i, j)),
                b_spec,
            ],
            out_specs=pl.BlockSpec((tm, tn), lambda i, j: (i, j)),
        ),
        compiler_params=pltpu.CompilerParams(
            dimension_semantics=("parallel", "parallel"),
            vmem_limit_bytes=48 * 1024 * 1024,
        ),
        cost_estimate=cost,
    )(x2, b)

    return out2.reshape(B, C, H, W)


def _reference(x, bias, negative_slope=0.2, scale=2.0 ** 0.5):
    v = x + jnp.reshape(bias, (1, -1, 1, 1))
    return jnp.where(v >= 0, v, negative_slope * v) * scale


if __name__ == "__main__":
    key = jax.random.PRNGKey(0)
    k_x, k_b, k_xs = jax.random.split(key, 3)

    # Main (lane-dense spatial) path: H*W >= 128.
    B, C, H, W = 2, 4, 16, 16
    x = jax.random.normal(k_x, (B, C, H, W), dtype=jnp.float32)
    # Module initializes bias to zeros; use random values so the bias-add path is
    # actually exercised (forward semantics hold for any parameter value).
    bias = jax.random.normal(k_b, (1, C, 1, 1), dtype=jnp.float32)

    out = fused_leaky_relu(x, bias)
    jax.block_until_ready(out)
    ref = _reference(x, bias)
    assert out.shape == ref.shape, "shape mismatch"
    assert jnp.allclose(out, ref, atol=1e-5, rtol=1e-5), "value mismatch"

    # Small-spatial path: H*W < 128 (channels folded into the lane axis).
    xs = jax.random.normal(k_xs, (2, 4, 4, 4), dtype=jnp.float32)
    outs = fused_leaky_relu(xs, bias)
    jax.block_until_ready(outs)
    refs = _reference(xs, bias)
    assert jnp.allclose(outs, refs, atol=1e-5, rtol=1e-5), "small-path mismatch"

    print("KERNEL_OK")
</pallas_src>

<mosaic_0001>
module attributes {stable_mosaic.version = 11 : i64} {
  func.func @_fused_lrelu_kernel(%arg0: i32, %arg1: i32, %arg2: memref<8x256xf32, #tpu.memory_space<vmem>>, %arg3: memref<8x1xf32, #tpu.memory_space<vmem>>, %arg4: memref<8x256xf32, #tpu.memory_space<vmem>>) attributes {dimension_semantics = [#tpu.dimension_semantics<parallel>, #tpu.dimension_semantics<parallel>], iteration_bounds = array<i64: 1, 1>, scalar_prefetch = 0 : i64, scratch_operands = 0 : i64, tpu.core_type = #tpu.core_type<tc>, window_params = [{transform_indices = @transform_0, window_bounds = array<i64: 8, 256>}, {transform_indices = @transform_1, window_bounds = array<i64: 8, 1>}, {transform_indices = @transform_2, window_bounds = array<i64: 8, 256>}]} {
    %c0 = arith.constant 0 : index
    %c0_0 = arith.constant 0 : index
    %0 = vector.load %arg2[%c0, %c0_0] : memref<8x256xf32, #tpu.memory_space<vmem>>, vector<8x256xf32>
    %c0_1 = arith.constant 0 : index
    %c0_2 = arith.constant 0 : index
    %1 = vector.load %arg3[%c0_1, %c0_2] : memref<8x1xf32, #tpu.memory_space<vmem>>, vector<8x1xf32>
    %2 = vector.broadcast %1 : vector<8x1xf32> to vector<8x256xf32>
    %3 = arith.addf %0, %2 : vector<8x256xf32>
    %cst = arith.constant 0.000000e+00 : f32
    %4 = vector.broadcast %cst : f32 to vector<8x256xf32>
    %5 = arith.cmpf oge, %3, %4 : vector<8x256xf32>
    %cst_3 = arith.constant 2.000000e-01 : f32
    %6 = vector.broadcast %cst_3 : f32 to vector<8x256xf32>
    %7 = arith.mulf %3, %6 : vector<8x256xf32>
    %8 = arith.select %5, %3, %7 : vector<8x256xi1>, vector<8x256xf32>
    %cst_4 = arith.constant 1.41421354 : f32
    %9 = vector.broadcast %cst_4 : f32 to vector<8x256xf32>
    %10 = arith.mulf %8, %9 : vector<8x256xf32>
    %c0_5 = arith.constant 0 : index
    %c0_6 = arith.constant 0 : index
    %11 = vector.load %arg4[%c0_5, %c0_6] : memref<8x256xf32, #tpu.memory_space<vmem>>, vector<8x256xf32>
    tpu.vector_store %arg4[%c0_5, %c0_6], %10 {strides = array<i32>} : memref<8x256xf32, #tpu.memory_space<vmem>>, vector<8x256xf32>,
    return
  }
  func.func @transform_0(%arg0: i32, %arg1: i32) -> (i32, i32) {
    %c0_i32 = arith.constant 0 : i32
    return %arg0, %arg1 : i32, i32
  }
  func.func @transform_1(%arg0: i32, %arg1: i32) -> (i32, i32) {
    %c0_i32 = arith.constant 0 : i32
    %c0_i32_0 = arith.constant 0 : i32
    return %arg0, %c0_i32 : i32, i32
  }
  func.func @transform_2(%arg0: i32, %arg1: i32) -> (i32, i32) {
    %c0_i32 = arith.constant 0 : i32
    return %arg0, %arg1 : i32, i32
  }
}

</mosaic_0001>

<llo_original>
// kernel: tpu_custom_call.1
$region0: #{tpu_custom_call.1}
  #allocation0 [shape = 'u32[]', space=smem, size = 0x4, offset = 0x4, fixed_abs, tag = 'smem constant byte address 0x4 - core index']
  #allocation1 [shape = 'u32[144,128]{1,0:T(1,128)}', space=vmem, size = 0x12000, scoped, tag = 'internal scratch']
  %s0 = inlined_call_operand.hbm [shape: f32[8,256], index: 0, kind: input, shape index: {}]
  %s1 = inlined_call_operand.vmem [shape: f32[8,1], index: 1, kind: input, shape index: {}]
  %s2 = inlined_call_operand.hbm [shape: f32[8,256], index: 2, kind: output, shape index: {}]
  %s3 = sld [smem:[#allocation0]]
  $region22: #{tpu_custom_call.1} parent=0
    _
  %s5 = ssub.s32 1, %s3
  %s6 = scalar_select 0, %s5, %s3
  $region1: #{tpu_custom_call.1} parent=0
    #allocation2 [shape = 'u8[8192]{0}', space=vmem, size = 0x2000, scoped, tag = 'input window, operand 0, single buffered']
    #allocation3 [shape = 's32[1]{0}', space=sflag, size = 0x4, scoped, tag = 'scoped memory for tpu_custom_call.1']
    #allocation4 [shape = 's32[1]{0}', space=sflag, size = 0x4, scoped, tag = 'scoped memory for tpu_custom_call.1']
    #allocation5 [shape = 'u8[8192]{0}', space=vmem, size = 0x2000, scoped, tag = 'output window, operand 0, single buffered']
    %7 = vsyncpa [#allocation3], 0
    %8 = vsyncpa [#allocation4], 0
    // Predicated region
    $region2: #{tpu_custom_call.1} parent=1 // pred_check
      _
    $region3: #{tpu_custom_call.1} parent=1 // pred_check_branch
      %10 = sbr.rel (0) target = $region5
    $region4: #{tpu_custom_call.1} parent=1 // pred_region
      %s12 = ssub.s32 256, 256
      %13 = vsyncadd [#allocation3], %s12
      %s15 = sshll.u32 [#allocation2], 4
      %s16 = int_to_ptr.vmem [resolvable:$true] %s15
      %18 = dma.hbm_to_vmem [thread:$0]  %s0, 256, %s16, [#allocation3]
    $region5: #{tpu_custom_call.1} parent=1 // pred_fallthru
      _
    // Predicated region
    $region6: #{tpu_custom_call.1} parent=1 // pred_check
      _
    $region7: #{tpu_custom_call.1} parent=1 // pred_check_branch
      %20 = sbr.rel (0) target = $region9
    $region8: #{tpu_custom_call.1} parent=1 // pred_region
      _
    $region9: #{tpu_custom_call.1} parent=1 // pred_fallthru
      _
    // Predicated region
    $region10: #{tpu_custom_call.1} parent=1 // pred_check
      _
    $region11: #{tpu_custom_call.1} parent=1 // pred_check_branch
      %22 = sbr.rel (0) target = $region13
    $region12: #{tpu_custom_call.1} parent=1 // pred_region
      %23 = dma.done [#allocation3], 256
    $region13: #{tpu_custom_call.1} parent=1 // pred_fallthru
      _
    %v24 = vld [vmem:[#allocation2] sm:$0xff]
    %v25 = vld [vmem:[#allocation2 + $0x8] sm:$0xff]
    %v26 = vld [vmem:[%s1] sm:$0xff]
    %28 = vset.pattern.permute.xlu0 0
    %29 = vperm.xlu0 %28, %v26
    %v30 = vpop.permute.xlu0 %29
    %v32 = vadd.f32 %v24, %v30
    %v33 = vadd.f32 %v25, %v30
    %vm34 = vcmp.ge.f32.partialorder %v32, 0.0
    %vm35 = vcmp.ge.f32.partialorder %v33, 0.0
    %v36 = vmul.f32 %v32, 0.2
    %v37 = vmul.f32 %v33, 0.2
    %v38 = vsel %vm34, %v32, %v36
    %v39 = vsel %vm35, %v33, %v37
    %v40 = vmul.f32 %v38, 1.4142135
    %v41 = vmul.f32 %v39, 1.4142135
    %42 = vst [vmem:[#allocation5] sm:$0xff] %v40
    %43 = vst [vmem:[#allocation5 + $0x8] sm:$0xff] %v41
    // Predicated region
    $region14: #{tpu_custom_call.1} parent=1 // pred_check
      _
    $region15: #{tpu_custom_call.1} parent=1 // pred_check_branch
      %45 = sbr.rel (0) target = $region17
    $region16: #{tpu_custom_call.1} parent=1 // pred_region
      %s47 = ssub.s32 256, 256
      %48 = vsyncadd [#allocation4], %s47
      %s50 = sshll.u32 [#allocation5], 4
      %s51 = int_to_ptr.vmem [resolvable:$true] %s50
      %53 = dma.vmem_to_hbm [thread:$0]  %s51, 256, %s2, [#allocation4]
    $region17: #{tpu_custom_call.1} parent=1 // pred_fallthru
      _
    // Predicated region
    $region18: #{tpu_custom_call.1} parent=1 // pred_check
      _
    $region19: #{tpu_custom_call.1} parent=1 // pred_check_branch
      %55 = sbr.rel (0) target = $region21
    $region20: #{tpu_custom_call.1} parent=1 // pred_region
      %56 = dma.done [#allocation4], 256
    $region21: #{tpu_custom_call.1} parent=1 // pred_fallthru
      _
    %57 = vsyncpa [#allocation3], 1
    %58 = vsyncpa [#allocation4], 1

</llo_original>
